<compile_context>
chip_gen: v7x
topology: tpu7x:2x2x1
jax: 0.10.0
libtpu: 0.0.40
codegen_flags: <defaults>
</compile_context>

<pallas_src>
import jax
import jax.numpy as jnp
from jax.experimental import pallas as pl
from jax.experimental.pallas import tpu as pltpu

# Number of HBM->HBM copies kept in flight (perf review suggests 4-8).  More
# in-flight DMAs hide per-block descriptor/launch latency for scattered ids.
DMA_RING = 4


def _make_dma_gather_kernel(rows_per_block, num_blocks, ring=DMA_RING):
    """Build a kernel that gathers `num_blocks` row-blocks of `rows_per_block`
    rows each, entirely with asynchronous HBM->HBM DMAs (no VMEM staging)."""
    n_prime = min(ring, num_blocks)

    def kernel(ids_ref, table_ref, out_ref, sems):
        # ids_ref   : SMEM (scalar prefetch), int32[num_blocks] block ids.
        # table_ref : raw HBM ref (memory_space=pl.ANY), (num_nodes, dim).
        # out_ref   : raw HBM ref (memory_space=pl.ANY), (num_blocks*rpb, dim).
        # sems      : ring of DMA-completion semaphores.

        def issue(i):
            src_row = ids_ref[i] * rows_per_block
            pltpu.make_async_copy(
                table_ref.at[pl.ds(src_row, rows_per_block), :],
                out_ref.at[pl.ds(i * rows_per_block, rows_per_block), :],
                sems.at[i % ring],
            ).start()

        def retire(i):
            # The wait descriptor only needs the transfer size and the
            # semaphore slot; the src index is a dummy (same-size slice).
            pltpu.make_async_copy(
                table_ref.at[pl.ds(0, rows_per_block), :],
                out_ref.at[pl.ds(i * rows_per_block, rows_per_block), :],
                sems.at[i % ring],
            ).wait()

        # Prime the ring with the first n_prime copies.
        @pl.loop(0, n_prime)
        def _prime(i):
            issue(i)

        # Steady state: retire the copy occupying this slot, then reuse it.
        if n_prime < num_blocks:
            @pl.loop(n_prime, num_blocks)
            def _steady(i):
                retire(i - ring)
                issue(i)

        # Drain the copies still in flight.
        @pl.loop(num_blocks - n_prime, num_blocks)
        def _drain(i):
            retire(i)

    return kernel


def node2vec_gather_rows(emb_table, block_ids, rows_per_block):
    """Gather row-blocks of the embedding table with a Pallas DMA kernel.

    emb_table      : (num_nodes, dim) float32 embedding table (HBM)
    block_ids      : (num_blocks,) int32; block_ids[i] selects rows
                     [block_ids[i]*rows_per_block, (block_ids[i]+1)*rows_per_block)
    rows_per_block : row-block granularity (any value >= 1; no divisibility or
                     sublane-alignment requirement on the DMA path)
    returns        : (num_blocks*rows_per_block, dim) float32

    Caller must keep block_ids in range; out-of-range ids are only caught by
    the runtime DMA bounds check.
    """
    num_nodes, dim = emb_table.shape
    num_blocks = int(block_ids.shape[0])
    assert num_blocks >= 1, "need at least one block id"
    assert 1 <= rows_per_block <= num_nodes, "rows_per_block out of range"
    block_ids = block_ids.astype(jnp.int32)

    out_rows = num_blocks * rows_per_block
    itemsize = emb_table.dtype.itemsize
    out_bytes = out_rows * dim * itemsize
    # Pure memory op: read + write of the gathered bytes, zero FLOPs.
    cost = pl.CostEstimate(flops=0, transcendentals=0, bytes_accessed=2 * out_bytes)

    kernel = _make_dma_gather_kernel(rows_per_block, num_blocks, DMA_RING)

    grid_spec = pltpu.PrefetchScalarGridSpec(
        num_scalar_prefetch=1,
        grid=(1,),
        in_specs=[pl.BlockSpec(memory_space=pl.ANY)],   # table stays in HBM
        out_specs=pl.BlockSpec(memory_space=pl.ANY),    # output written by DMA
        scratch_shapes=[pltpu.SemaphoreType.DMA((DMA_RING,))],
    )

    # NOTE(v7x): the single grid step issues all DMA descriptors from one
    # TensorCore; descriptor issue is cheap and the copy itself runs on the
    # (shared) DMA engines, so this path is HBM-BW-bound, not core-bound.
    return pl.pallas_call(
        kernel,
        out_shape=jax.ShapeDtypeStruct((out_rows, dim), emb_table.dtype),
        grid_spec=grid_spec,
        compiler_params=pltpu.CompilerParams(
            dimension_semantics=("arbitrary",),
        ),
        cost_estimate=cost,
    )(block_ids, emb_table)


class Node2vecPallas:
    """Minimal JAX counterpart of models/Node2vec.py (forward pass only).

    The embedding table plays the role of
    torch_geometric.nn.Node2Vec.embedding.weight (embedding_dim == nhid).
    """

    def __init__(self, num_nodes, nhid, key):
        # PyG Node2Vec initializes the embedding with a standard normal.
        self.embedding = jax.random.normal(key, (num_nodes, nhid), dtype=jnp.float32)
        self.num_nodes = num_nodes
        self.nhid = nhid

    def forward(self, x, edge_index, edge_weight=None):
        # z = self.model()  -> the full embedding table in node order.
        # This is an identity gather; returning the table directly avoids a
        # pointless HBM->VMEM->HBM round trip.
        del x, edge_index, edge_weight
        return self.embedding

    def lookup_blocks(self, block_ids, rows_per_block):
        # Pallas HBM->HBM DMA gather (mirrors PyG Node2Vec.__call__(batch) at
        # row-block granularity) for batched / shuffled lookups.
        return node2vec_gather_rows(self.embedding, block_ids, rows_per_block)


if __name__ == "__main__":
    key = jax.random.PRNGKey(0)
    k_emb, k_x = jax.random.split(key)

    # Small synthetic graph: 64 nodes, nhid=32, nfeat=16, 128 edges.
    num_nodes, nhid, nfeat, num_edges = 64, 32, 16, 128
    model = Node2vecPallas(num_nodes, nhid, k_emb)

    # Forward inputs (unused by the reference forward, kept for signature parity).
    x = jax.random.normal(k_x, (num_nodes, nfeat), dtype=jnp.float32)
    edge_index = jnp.stack(
        [
            jnp.arange(num_edges, dtype=jnp.int32) % num_nodes,
            (jnp.arange(num_edges, dtype=jnp.int32) * 7 + 3) % num_nodes,
        ]
    )

    # 1) forward(): full table (identity path, no kernel launch needed).
    z = model.forward(x, edge_index)
    assert z.shape == (num_nodes, nhid) and z.dtype == jnp.float32
    assert bool(jnp.array_equal(z, model.embedding))

    # 2) Pallas DMA gather, identity block ids with 8 blocks (> DMA_RING, so the
    #    prime / steady-state / drain phases of the ring are all exercised).
    #    Must reproduce forward() bit-exactly through the kernel path.
    rows_per_block = 8
    n_blocks = num_nodes // rows_per_block
    ident = jnp.arange(n_blocks, dtype=jnp.int32)
    z_kernel = jax.block_until_ready(model.lookup_blocks(ident, rows_per_block))
    assert z_kernel.shape == (num_nodes, nhid)
    assert bool(jnp.array_equal(z_kernel, model.embedding))

    # 3) Pallas DMA gather, shuffled block ids (data-dependent source offsets).
    rows_per_block2 = 16
    n_blocks2 = num_nodes // rows_per_block2
    perm = jnp.array([2, 0, 3, 1], dtype=jnp.int32)
    z_perm = jax.block_until_ready(model.lookup_blocks(perm, rows_per_block2))
    ref = model.embedding.reshape(n_blocks2, rows_per_block2, nhid)[perm].reshape(-1, nhid)
    assert bool(jnp.array_equal(z_perm, ref))

    # TODO(synk): model.fit()/loss() (random-walk sampling + SparseAdam training)
    # is a training loop, not part of the forward pass, so it is not kernelized.
    print("KERNEL_OK")
</pallas_src>

<mosaic_0001>
module attributes {stable_mosaic.version = 11 : i64} {
  func.func @kernel(%arg0: i32, %arg1: memref<8xi32, #tpu.memory_space<smem>>, %arg2: memref<64x32xf32, #tpu.memory_space<any>>, %arg3: memref<64x32xf32, #tpu.memory_space<any>>, %arg4: memref<4x!tpu.dma_semaphore, #tpu.memory_space<semaphore_mem>>) attributes {dimension_semantics = [#tpu.dimension_semantics<arbitrary>], iteration_bounds = array<i64: 1>, scalar_prefetch = 1 : i64, scratch_operands = 1 : i64, tpu.core_type = #tpu.core_type<tc>, window_params = [{}, {}]} {
    %c0_i32 = arith.constant 0 : i32
    %c4_i32 = arith.constant 4 : i32
    %0 = arith.addi %c0_i32, %c4_i32 : i32
    %c1_i32 = arith.constant 1 : i32
    scf.for %arg5 = %c0_i32 to %0 step %c1_i32  : i32 {
      %c1_i32_9 = arith.constant 1 : i32
      %3 = arith.muli %arg5, %c1_i32_9 : i32
      %c0_i32_10 = arith.constant 0 : i32
      %4 = arith.addi %c0_i32_10, %3 : i32
      %5 = arith.index_cast %4 : i32 to index
      %6 = memref.load %arg1[%5] : memref<8xi32, #tpu.memory_space<smem>>
      %c8_i32 = arith.constant 8 : i32
      %7 = arith.muli %6, %c8_i32 : i32
      %c8_i32_11 = arith.constant 8 : i32
      %8 = arith.muli %4, %c8_i32_11 : i32
      %c4_i32_12 = arith.constant 4 : i32
      %c0_i32_13 = arith.constant 0 : i32
      %9 = arith.cmpi eq, %c4_i32_12, %c0_i32_13 : i32
      %c1_i32_14 = arith.constant 1 : i32
      %10 = arith.select %9, %c1_i32_14, %c4_i32_12 : i32
      %11 = arith.remsi %4, %10 : i32
      %c0_i32_15 = arith.constant 0 : i32
      %12 = arith.cmpi ne, %11, %c0_i32_15 : i32
      %c0_i32_16 = arith.constant 0 : i32
      %13 = arith.cmpi slt, %11, %c0_i32_16 : i32
      %c0_i32_17 = arith.constant 0 : i32
      %14 = arith.cmpi slt, %10, %c0_i32_17 : i32
      %15 = arith.xori %13, %14 : i1
      %16 = arith.andi %15, %12 : i1
      %17 = arith.addi %11, %10 : i32
      %18 = arith.select %16, %17, %11 : i32
      %c0_i32_18 = arith.constant 0 : i32
      %19 = tpu.memref_slice %arg2[%7, %c0_i32_18] : memref<64x32xf32, #tpu.memory_space<any>> -> memref<8x32xf32, #tpu.memory_space<any>>
      %c0_i32_19 = arith.constant 0 : i32
      %20 = tpu.memref_slice %arg3[%8, %c0_i32_19] : memref<64x32xf32, #tpu.memory_space<any>> -> memref<8x32xf32, #tpu.memory_space<any>>
      %21 = tpu.memref_slice %arg4[%18] : memref<4x!tpu.dma_semaphore, #tpu.memory_space<semaphore_mem>> -> memref<1x!tpu.dma_semaphore, #tpu.memory_space<semaphore_mem>>
      %22 = tpu.memref_squeeze %21 : memref<1x!tpu.dma_semaphore, #tpu.memory_space<semaphore_mem>> -> memref<!tpu.dma_semaphore, #tpu.memory_space<semaphore_mem>>
      tpu.enqueue_dma source(%19 : memref<8x32xf32, #tpu.memory_space<any>>) target(%20 : memref<8x32xf32, #tpu.memory_space<any>>) target_semaphore(%22 : memref<!tpu.dma_semaphore, #tpu.memory_space<semaphore_mem>>)
    }
    %c4_i32_0 = arith.constant 4 : i32
    %c0_i32_1 = arith.constant 0 : i32
    %c4_i32_2 = arith.constant 4 : i32
    %1 = arith.addi %c0_i32_1, %c4_i32_2 : i32
    %c1_i32_3 = arith.constant 1 : i32
    scf.for %arg5 = %c0_i32_1 to %1 step %c1_i32_3  : i32 {
      %c1_i32_9 = arith.constant 1 : i32
      %3 = arith.muli %arg5, %c1_i32_9 : i32
      %c4_i32_10 = arith.constant 4 : i32
      %4 = arith.addi %c4_i32_10, %3 : i32
      %c4_i32_11 = arith.constant 4 : i32
      %5 = arith.subi %4, %c4_i32_11 : i32
      %c8_i32 = arith.constant 8 : i32
      %6 = arith.muli %5, %c8_i32 : i32
      %c4_i32_12 = arith.constant 4 : i32
      %c0_i32_13 = arith.constant 0 : i32
      %7 = arith.cmpi eq, %c4_i32_12, %c0_i32_13 : i32
      %c1_i32_14 = arith.constant 1 : i32
      %8 = arith.select %7, %c1_i32_14, %c4_i32_12 : i32
      %9 = arith.remsi %5, %8 : i32
      %c0_i32_15 = arith.constant 0 : i32
      %10 = arith.cmpi ne, %9, %c0_i32_15 : i32
      %c0_i32_16 = arith.constant 0 : i32
      %11 = arith.cmpi slt, %9, %c0_i32_16 : i32
      %c0_i32_17 = arith.constant 0 : i32
      %12 = arith.cmpi slt, %8, %c0_i32_17 : i32
      %13 = arith.xori %11, %12 : i1
      %14 = arith.andi %13, %10 : i1
      %15 = arith.addi %9, %8 : i32
      %16 = arith.select %14, %15, %9 : i32
      %c0_i32_18 = arith.constant 0 : i32
      %c0_i32_19 = arith.constant 0 : i32
      %17 = tpu.memref_slice %arg2[%c0_i32_18, %c0_i32_19] : memref<64x32xf32, #tpu.memory_space<any>> -> memref<8x32xf32, #tpu.memory_space<any>>
      %c0_i32_20 = arith.constant 0 : i32
      %18 = tpu.memref_slice %arg3[%6, %c0_i32_20] : memref<64x32xf32, #tpu.memory_space<any>> -> memref<8x32xf32, #tpu.memory_space<any>>
      %19 = tpu.memref_slice %arg4[%16] : memref<4x!tpu.dma_semaphore, #tpu.memory_space<semaphore_mem>> -> memref<1x!tpu.dma_semaphore, #tpu.memory_space<semaphore_mem>>
      %20 = tpu.memref_squeeze %19 : memref<1x!tpu.dma_semaphore, #tpu.memory_space<semaphore_mem>> -> memref<!tpu.dma_semaphore, #tpu.memory_space<semaphore_mem>>
      tpu.wait_dma2 semaphore(%20 : memref<!tpu.dma_semaphore, #tpu.memory_space<semaphore_mem>>) src(%17 : memref<8x32xf32, #tpu.memory_space<any>>) dst(%18 : memref<8x32xf32, #tpu.memory_space<any>>)
      %21 = arith.index_cast %4 : i32 to index
      %22 = memref.load %arg1[%21] : memref<8xi32, #tpu.memory_space<smem>>
      %c8_i32_21 = arith.constant 8 : i32
      %23 = arith.muli %22, %c8_i32_21 : i32
      %c8_i32_22 = arith.constant 8 : i32
      %24 = arith.muli %4, %c8_i32_22 : i32
      %c4_i32_23 = arith.constant 4 : i32
      %c0_i32_24 = arith.constant 0 : i32
      %25 = arith.cmpi eq, %c4_i32_23, %c0_i32_24 : i32
      %c1_i32_25 = arith.constant 1 : i32
      %26 = arith.select %25, %c1_i32_25, %c4_i32_23 : i32
      %27 = arith.remsi %4, %26 : i32
      %c0_i32_26 = arith.constant 0 : i32
      %28 = arith.cmpi ne, %27, %c0_i32_26 : i32
      %c0_i32_27 = arith.constant 0 : i32
      %29 = arith.cmpi slt, %27, %c0_i32_27 : i32
      %c0_i32_28 = arith.constant 0 : i32
      %30 = arith.cmpi slt, %26, %c0_i32_28 : i32
      %31 = arith.xori %29, %30 : i1
      %32 = arith.andi %31, %28 : i1
      %33 = arith.addi %27, %26 : i32
      %34 = arith.select %32, %33, %27 : i32
      %c0_i32_29 = arith.constant 0 : i32
      %35 = tpu.memref_slice %arg2[%23, %c0_i32_29] : memref<64x32xf32, #tpu.memory_space<any>> -> memref<8x32xf32, #tpu.memory_space<any>>
      %c0_i32_30 = arith.constant 0 : i32
      %36 = tpu.memref_slice %arg3[%24, %c0_i32_30] : memref<64x32xf32, #tpu.memory_space<any>> -> memref<8x32xf32, #tpu.memory_space<any>>
      %37 = tpu.memref_slice %arg4[%34] : memref<4x!tpu.dma_semaphore, #tpu.memory_space<semaphore_mem>> -> memref<1x!tpu.dma_semaphore, #tpu.memory_space<semaphore_mem>>
      %38 = tpu.memref_squeeze %37 : memref<1x!tpu.dma_semaphore, #tpu.memory_space<semaphore_mem>> -> memref<!tpu.dma_semaphore, #tpu.memory_space<semaphore_mem>>
      tpu.enqueue_dma source(%35 : memref<8x32xf32, #tpu.memory_space<any>>) target(%36 : memref<8x32xf32, #tpu.memory_space<any>>) target_semaphore(%38 : memref<!tpu.dma_semaphore, #tpu.memory_space<semaphore_mem>>)
    }
    %c4_i32_4 = arith.constant 4 : i32
    %c0_i32_5 = arith.constant 0 : i32
    %c4_i32_6 = arith.constant 4 : i32
    %2 = arith.addi %c0_i32_5, %c4_i32_6 : i32
    %c1_i32_7 = arith.constant 1 : i32
    scf.for %arg5 = %c0_i32_5 to %2 step %c1_i32_7  : i32 {
      %c1_i32_9 = arith.constant 1 : i32
      %3 = arith.muli %arg5, %c1_i32_9 : i32
      %c4_i32_10 = arith.constant 4 : i32
      %4 = arith.addi %c4_i32_10, %3 : i32
      %c8_i32 = arith.constant 8 : i32
      %5 = arith.muli %4, %c8_i32 : i32
      %c4_i32_11 = arith.constant 4 : i32
      %c0_i32_12 = arith.constant 0 : i32
      %6 = arith.cmpi eq, %c4_i32_11, %c0_i32_12 : i32
      %c1_i32_13 = arith.constant 1 : i32
      %7 = arith.select %6, %c1_i32_13, %c4_i32_11 : i32
      %8 = arith.remsi %4, %7 : i32
      %c0_i32_14 = arith.constant 0 : i32
      %9 = arith.cmpi ne, %8, %c0_i32_14 : i32
      %c0_i32_15 = arith.constant 0 : i32
      %10 = arith.cmpi slt, %8, %c0_i32_15 : i32
      %c0_i32_16 = arith.constant 0 : i32
      %11 = arith.cmpi slt, %7, %c0_i32_16 : i32
      %12 = arith.xori %10, %11 : i1
      %13 = arith.andi %12, %9 : i1
      %14 = arith.addi %8, %7 : i32
      %15 = arith.select %13, %14, %8 : i32
      %c0_i32_17 = arith.constant 0 : i32
      %c0_i32_18 = arith.constant 0 : i32
      %16 = tpu.memref_slice %arg2[%c0_i32_17, %c0_i32_18] : memref<64x32xf32, #tpu.memory_space<any>> -> memref<8x32xf32, #tpu.memory_space<any>>
      %c0_i32_19 = arith.constant 0 : i32
      %17 = tpu.memref_slice %arg3[%5, %c0_i32_19] : memref<64x32xf32, #tpu.memory_space<any>> -> memref<8x32xf32, #tpu.memory_space<any>>
      %18 = tpu.memref_slice %arg4[%15] : memref<4x!tpu.dma_semaphore, #tpu.memory_space<semaphore_mem>> -> memref<1x!tpu.dma_semaphore, #tpu.memory_space<semaphore_mem>>
      %19 = tpu.memref_squeeze %18 : memref<1x!tpu.dma_semaphore, #tpu.memory_space<semaphore_mem>> -> memref<!tpu.dma_semaphore, #tpu.memory_space<semaphore_mem>>
      tpu.wait_dma2 semaphore(%19 : memref<!tpu.dma_semaphore, #tpu.memory_space<semaphore_mem>>) src(%16 : memref<8x32xf32, #tpu.memory_space<any>>) dst(%17 : memref<8x32xf32, #tpu.memory_space<any>>)
    }
    %c4_i32_8 = arith.constant 4 : i32
    return
  }
}

</mosaic_0001>

<llo_original>
// kernel: tpu_custom_call.1
$region0: #{tpu_custom_call.1}
  #allocation0 [shape = 'u32[]', space=smem, size = 0x4, offset = 0x4, fixed_abs, tag = 'smem constant byte address 0x4 - core index']
  #allocation1 [shape = 'u32[144,128]{1,0:T(1,128)}', space=vmem, size = 0x12000, scoped, tag = 'internal scratch']
  #allocation2 [shape = 's32[4]{0}', space=sflag, size = 0x10, scoped, tag = 'scratch operand']
  #allocation3 [shape = 's32[1]{0}', space=sflag, size = 0x4, scoped, tag = 'scoped memory for tpu_custom_call.1']
  #allocation4 [shape = 'u8[512]{0}', space=smem, size = 0x200, scoped, tag = 'prefetched SMEM operand 0']
  #allocation5 [shape = 's32[]', space=sflag, size = 0x4, offset = 0, fixed_abs, tag = 'sflag constant byte address 0x0 - dummy sync flag']
  #allocation6 [shape = 's32[]', space=sflag, size = 0x4, offset = 0, fixed_abs, tag = 'sflag constant byte address 0x0 - dummy sync flag']
  %s0 = inlined_call_operand.vmem [shape: s32[8], index: 0, kind: input, shape index: {}]
  %s1 = inlined_call_operand.vmem [shape: f32[64,32], index: 1, kind: input, shape index: {}]
  %s2 = inlined_call_operand.vmem [shape: f32[64,32], index: 2, kind: output, shape index: {}]
  %s3 = sld [smem:[#allocation0]]
  $region91: #{tpu_custom_call.1} parent=0
    _
  %s5 = ssub.s32 1, %s3
  %s6 = scalar_select 0, %s5, %s3
  %s7 = sshll.u32 %s0, 4
  %s8 = int_to_ptr.vmem [resolvable:$true] %s7
  %10 = dma.vmem_to_smem %s8, 16, [#allocation4], [#allocation3]
  %11 = dma.done [#allocation3], 16
  %12 = sfence
  loop: start=0, step=1, limit=4
  $region2: #{tpu_custom_call.1} parent=0 // loop_pre_header
    _
  $region3: #{tpu_custom_call.1} parent=0 // loop_header
    %s14 = sphi 0, %s18
    %p15 = scmp.ge.s32.totalorder %s14, 4
  $region4: #{tpu_custom_call.1} parent=0 // loop_header_branch
    %17 = sbr.rel (%p15) target = $region8
  $region5: #{tpu_custom_call.1} parent=0 // loop_body
    %s19 = sld [smem:[#allocation4 + %s14]]
    %s20 = smul.u32 %s19, 8
    %s21 = smul.u32 %s14, 8
    %p22 = scmp.lt.s32.totalorder %s14, 0
    %s23 = ssub.s32 0, %s14
    %s24 = scalar_select %p22, %s23, %s14
    %s25 = sand.u32 %s24, 3
    %s26 = ssub.s32 0, %s25
    %s27 = scalar_select %p22, %s26, %s25
    %p28 = scmp.ne.s32.totalorder %s27, 0
    %p29 = scmp.lt.s32.totalorder %s27, 0
    %p30 = pnand %p29, %p28
    %p31 = pneg %p30
    %s32 = sadd.s32 %s27, 4
    %s33 = scalar_select %p31, %s32, %s27
    %s34 = scalar_lea.vmem %s1, %s20
    %s35 = scalar_lea.vmem %s2, %s21
    %s36 = scalar_lea.sflag [#allocation2], %s33
    %p38 = scmp.lt.u32.totalorder 8, 8
    %p39 = pneg %p38
    // Predicated region
    $region9: #{tpu_custom_call.1} parent=5 // pred_check
      _
    $region10: #{tpu_custom_call.1} parent=5 // pred_check_branch
      %41 = sbr.rel (%p38) target = $region12
    $region11: #{tpu_custom_call.1} parent=5 // pred_region
      %s56 = sand.u32 8, 7
      %p57 = scmp.eq.s32.totalorder %s56, 0
      // Predicated region
      $region24: #{tpu_custom_call.1} parent=11 // pred_check
        %p58 = pneg %p57
      $region25: #{tpu_custom_call.1} parent=11 // pred_check_branch
        %60 = sbr.rel (%p58) target = $region27
      $region26: #{tpu_custom_call.1} parent=11 // pred_region
        loop: start=0, step=1, limit=1
        $region28: #{tpu_custom_call.1} parent=26 // loop_pre_header
          _
        $region29: #{tpu_custom_call.1} parent=26 // loop_header
          %s62 = sphi 0, %s66
          %p63 = scmp.ge.s32.totalorder %s62, 1
          %s67 = sphi %s34, %s34
          %s68 = sphi %s35, %s35
        $region30: #{tpu_custom_call.1} parent=26 // loop_header_branch
          %65 = sbr.rel (%p63) target = $region34
        $region31: #{tpu_custom_call.1} parent=26 // loop_body
          %v69 = vld [vmem:[%s67] sm:$0xff]
          %70 = vst [vmem:[%s68] sm:$0xff] %v69
        $region32: #{tpu_custom_call.1} parent=26 // loop_footer
          %s66 = sadd.s32 1, %s62
        $region33: #{tpu_custom_call.1} parent=26 // loop_footer_branch
          %61 = sbr.rel target = $region29
        $region34: #{tpu_custom_call.1} parent=26 // loop_exit
          _
      $region27: #{tpu_custom_call.1} parent=11 // pred_fallthru
        _
      %p71 = pneg %p57
      // Predicated region
      $region35: #{tpu_custom_call.1} parent=11 // pred_check
        _
      $region36: #{tpu_custom_call.1} parent=11 // pred_check_branch
        %73 = sbr.rel (%p57) target = $region38
      $region37: #{tpu_custom_call.1} parent=11 // pred_region
        %s74 = sand.u32 8, 7
      $region38: #{tpu_custom_call.1} parent=11 // pred_fallthru
        _
    $region12: #{tpu_custom_call.1} parent=5 // pred_fallthru
      _
    // Predicated region
    $region13: #{tpu_custom_call.1} parent=5 // pred_check
      %p42 = pneg %p38
    $region14: #{tpu_custom_call.1} parent=5 // pred_check_branch
      %44 = sbr.rel (%p42) target = $region16
    $region15: #{tpu_custom_call.1} parent=5 // pred_region
      %s45 = sshllo.u32 0, 8
      loop: start=0, step=1, limit=1
      $region17: #{tpu_custom_call.1} parent=15 // loop_pre_header
        _
      $region18: #{tpu_custom_call.1} parent=15 // loop_header
        %s47 = sphi 0, %s51
        %p48 = scmp.ge.s32.totalorder %s47, 1
        %s52 = sphi %s34, %s34
        %s53 = sphi %s35, %s35
      $region19: #{tpu_custom_call.1} parent=15 // loop_header_branch
        %50 = sbr.rel (%p48) target = $region23
      $region20: #{tpu_custom_call.1} parent=15 // loop_body
        %v54 = vld [vmem:[%s52] sm:%s45]
        %55 = vst [vmem:[%s53] sm:%s45] %v54
      $region21: #{tpu_custom_call.1} parent=15 // loop_footer
        %s51 = sadd.s32 1, %s47
      $region22: #{tpu_custom_call.1} parent=15 // loop_footer_branch
        %46 = sbr.rel target = $region18
      $region23: #{tpu_custom_call.1} parent=15 // loop_exit
        _
    $region16: #{tpu_custom_call.1} parent=5 // pred_fallthru
      _
    // Predicated region
    $region39: #{tpu_custom_call.1} parent=5 // pred_check
      _
    $region40: #{tpu_custom_call.1} parent=5 // pred_check_branch
      %77 = sbr.rel (0) target = $region42
    $region41: #{tpu_custom_call.1} parent=5 // pred_region
      %78 = vsyncadd %s36, 128
    $region42: #{tpu_custom_call.1} parent=5 // pred_fallthru
      _
  $region6: #{tpu_custom_call.1} parent=0 // loop_footer
    %s18 = sadd.s32 1, %s14
  $region7: #{tpu_custom_call.1} parent=0 // loop_footer_branch
    %13 = sbr.rel target = $region3
  $region8: #{tpu_custom_call.1} parent=0 // loop_exit
    _
  loop: start=0, step=1, limit=4
  $region43: #{tpu_custom_call.1} parent=0 // loop_pre_header
    _
  $region44: #{tpu_custom_call.1} parent=0 // loop_header
    %s80 = sphi 0, %s84
    %p81 = scmp.ge.s32.totalorder %s80, 4
  $region45: #{tpu_custom_call.1} parent=0 // loop_header_branch
    %83 = sbr.rel (%p81) target = $region49
  $region46: #{tpu_custom_call.1} parent=0 // loop_body
    %s85 = sadd.s32 %s80, 4
    %p86 = scmp.lt.s32.totalorder %s80, 0
    %s87 = ssub.s32 0, %s80
    %s88 = scalar_select %p86, %s87, %s80
    %s89 = sand.u32 %s88, 3
    %s90 = ssub.s32 0, %s89
    %s91 = scalar_select %p86, %s90, %s89
    %p92 = scmp.ne.s32.totalorder %s91, 0
    %p93 = scmp.lt.s32.totalorder %s91, 0
    %p94 = pnand %p93, %p92
    %p95 = pneg %p94
    %s96 = sadd.s32 %s91, 4
    %s97 = scalar_select %p95, %s96, %s91
    %s98 = scalar_lea.sflag [#allocation2], %s97
    %s99 = smul.u32 8, 1
    %s100 = sshll.u32 %s99, 4
    %101 = dma.done %s98, %s100
    %s102 = sld [smem:[#allocation4 + %s85]]
    %s103 = smul.u32 %s102, 8
    %s104 = smul.u32 %s85, 8
    %p105 = scmp.lt.s32.totalorder %s85, 0
    %s106 = ssub.s32 0, %s85
    %s107 = scalar_select %p105, %s106, %s85
    %s108 = sand.u32 %s107, 3
    %s109 = ssub.s32 0, %s108
    %s110 = scalar_select %p105, %s109, %s108
    %p111 = scmp.ne.s32.totalorder %s110, 0
    %p112 = scmp.lt.s32.totalorder %s110, 0
    %p113 = pnand %p112, %p111
    %p114 = pneg %p113
    %s115 = sadd.s32 %s110, 4
    %s116 = scalar_select %p114, %s115, %s110
    %s117 = scalar_lea.vmem %s1, %s103
    %s118 = scalar_lea.vmem %s2, %s104
    %s119 = scalar_lea.sflag [#allocation2], %s116
    %p121 = scmp.lt.u32.totalorder 8, 8
    %p122 = pneg %p121
    // Predicated region
    $region50: #{tpu_custom_call.1} parent=46 // pred_check
      _
    $region51: #{tpu_custom_call.1} parent=46 // pred_check_branch
      %124 = sbr.rel (%p121) target = $region53
    $region52: #{tpu_custom_call.1} parent=46 // pred_region
      %s139 = sand.u32 8, 7
      %p140 = scmp.eq.s32.totalorder %s139, 0
      // Predicated region
      $region65: #{tpu_custom_call.1} parent=52 // pred_check
        %p141 = pneg %p140
      $region66: #{tpu_custom_call.1} parent=52 // pred_check_branch
        %143 = sbr.rel (%p141) target = $region68
      $region67: #{tpu_custom_call.1} parent=52 // pred_region
        loop: start=0, step=1, limit=1
        $region69: #{tpu_custom_call.1} parent=67 // loop_pre_header
          _
        $region70: #{tpu_custom_call.1} parent=67 // loop_header
          %s145 = sphi 0, %s149
          %p146 = scmp.ge.s32.totalorder %s145, 1
          %s150 = sphi %s117, %s117
          %s151 = sphi %s118, %s118
        $region71: #{tpu_custom_call.1} parent=67 // loop_header_branch
          %148 = sbr.rel (%p146) target = $region75
        $region72: #{tpu_custom_call.1} parent=67 // loop_body
          %v152 = vld [vmem:[%s150] sm:$0xff]
          %153 = vst [vmem:[%s151] sm:$0xff] %v152
        $region73: #{tpu_custom_call.1} parent=67 // loop_footer
          %s149 = sadd.s32 1, %s145
        $region74: #{tpu_custom_call.1} parent=67 // loop_footer_branch
          %144 = sbr.rel target = $region70
        $region75: #{tpu_custom_call.1} parent=67 // loop_exit
          _
      $region68: #{tpu_custom_call.1} parent=52 // pred_fallthru
        _
      %p154 = pneg %p140
      // Predicated region
      $region76: #{tpu_custom_call.1} parent=52 // pred_check
        _
      $region77: #{tpu_custom_call.1} parent=52 // pred_check_branch
        %156 = sbr.rel (%p140) target = $region79
      $region78: #{tpu_custom_call.1} parent=52 // pred_region
        %s157 = sand.u32 8, 7
      $region79: #{tpu_custom_call.1} parent=52 // pred_fallthru
        _
    $region53: #{tpu_custom_call.1} parent=46 // pred_fallthru
      _
    // Predicated region
    $region54: #{tpu_custom_call.1} parent=46 // pred_check
      %p125 = pneg %p121
    $region55: #{tpu_custom_call.1} parent=46 // pred_check_branch
      %127 = sbr.rel (%p125) target = $region57
    $region56: #{tpu_custom_call.1} parent=46 // pred_region
      %s128 = sshllo.u32 0, 8
      loop: start=0, step=1, limit=1
      $region58: #{tpu_custom_call.1} parent=56 // loop_pre_header
        _
      $region59: #{tpu_custom_call.1} parent=56 // loop_header
        %s130 = sphi 0, %s134
        %p131 = scmp.ge.s32.totalorder %s130, 1
        %s135 = sphi %s117, %s117
        %s136 = sphi %s118, %s118
      $region60: #{tpu_custom_call.1} parent=56 // loop_header_branch
        %133 = sbr.rel (%p131) target = $region64
      $region61: #{tpu_custom_call.1} parent=56 // loop_body
        %v137 = vld [vmem:[%s135] sm:%s128]
        %138 = vst [vmem:[%s136] sm:%s128] %v137
      $region62: #{tpu_custom_call.1} parent=56 // loop_footer
        %s134 = sadd.s32 1, %s130
      $region63: #{tpu_custom_call.1} parent=56 // loop_footer_branch
        %129 = sbr.rel target = $region59
      $region64: #{tpu_custom_call.1} parent=56 // loop_exit
        _
    $region57: #{tpu_custom_call.1} parent=46 // pred_fallthru
      _
    // Predicated region
    $region80: #{tpu_custom_call.1} parent=46 // pred_check
      _
    $region81: #{tpu_custom_call.1} parent=46 // pred_check_branch
      %160 = sbr.rel (0) target = $region83
    $region82: #{tpu_custom_call.1} parent=46 // pred_region
      %161 = vsyncadd %s119, 128
    $region83: #{tpu_custom_call.1} parent=46 // pred_fallthru
      _
  $region47: #{tpu_custom_call.1} parent=0 // loop_footer
    %s84 = sadd.s32 1, %s80
  $region48: #{tpu_custom_call.1} parent=0 // loop_footer_branch
    %79 = sbr.rel target = $region44
  $region49: #{tpu_custom_call.1} parent=0 // loop_exit
    _
  loop: start=0, step=1, limit=4
  $region84: #{tpu_custom_call.1} parent=0 // loop_pre_header
    _
  $region85: #{tpu_custom_call.1} parent=0 // loop_header
    %s163 = sphi 0, %s167
    %p164 = scmp.ge.s32.totalorder %s163, 4
  $region86: #{tpu_custom_call.1} parent=0 // loop_header_branch
    %166 = sbr.rel (%p164) target = $region90
  $region87: #{tpu_custom_call.1} parent=0 // loop_body
    %s168 = sadd.s32 %s163, 4
    %p169 = scmp.lt.s32.totalorder %s168, 0
    %s170 = ssub.s32 0, %s168
    %s171 = scalar_select %p169, %s170, %s168
    %s172 = sand.u32 %s171, 3
    %s173 = ssub.s32 0, %s172
    %s174 = scalar_select %p169, %s173, %s172
    %p175 = scmp.ne.s32.totalorder %s174, 0
    %p176 = scmp.lt.s32.totalorder %s174, 0
    %p177 = pnand %p176, %p175
    %p178 = pneg %p177
    %s179 = sadd.s32 %s174, 4
    %s180 = scalar_select %p178, %s179, %s174
    %s181 = scalar_lea.sflag [#allocation2], %s180
    %s182 = smul.u32 8, 1
    %s183 = sshll.u32 %s182, 4
    %184 = dma.done %s181, %s183
  $region88: #{tpu_custom_call.1} parent=0 // loop_footer
    %s167 = sadd.s32 1, %s163
  $region89: #{tpu_custom_call.1} parent=0 // loop_footer_branch
    %162 = sbr.rel target = $region85
  $region90: #{tpu_custom_call.1} parent=0 // loop_exit
    _
  %185 = vsyncmov [#allocation2]
  %s186 = vpop.sfrf %185
  %p187 = scmp.eq.s32.totalorder %s186, 0
  %p188 = pneg %p187
  %190 = shalt.err (%p188)
  %s191 = scalar_lea.sflag [#allocation2], 1
  %192 = vsyncmov %s191
  %s193 = vpop.sfrf %192
  %p194 = scmp.eq.s32.totalorder %s193, 0
  %p195 = pneg %p194
  %197 = shalt.err (%p195)
  %s198 = scalar_lea.sflag [#allocation2], 2
  %199 = vsyncmov %s198
  %s200 = vpop.sfrf %199
  %p201 = scmp.eq.s32.totalorder %s200, 0
  %p202 = pneg %p201
  %204 = shalt.err (%p202)
  %s205 = scalar_lea.sflag [#allocation2], 3
  %206 = vsyncmov %s205
  %s207 = vpop.sfrf %206
  %p208 = scmp.eq.s32.totalorder %s207, 0
  %p209 = pneg %p208
  %211 = shalt.err (%p209)

</llo_original>
